<compile_context>
chip_gen: v7x
topology: tpu7x:2x2x1
jax: 0.10.0
libtpu: 0.0.40
codegen_flags: <defaults>
</compile_context>

<pallas_src>
import jax
import jax.numpy as jnp
from jax.experimental import pallas as pl
from jax.experimental.pallas import tpu as pltpu

LANE = 128  # vreg lane width


def mlp_kernel(xT_ref, w1_ref, b1_ref, w2_ref, b2_ref, oT_ref):
    # xT_ref : (n_input,  tile)     VMEM, batch on lanes
    # w1_ref : (n_hidden, n_input)  VMEM, torch layout (== the column layout
    #                               the transposed kernel needs)
    # b1_ref : (n_hidden, 1)        VMEM column bias
    # w2_ref : (n_hidden, n_output) VMEM column layout
    # b2_ref : (n_output, 1)        VMEM column bias
    # oT_ref : (n_output, tile)     VMEM, lane-dense output
    n_input = xT_ref.shape[0]
    n_output = oT_ref.shape[0]

    xT = xT_ref[...]                                    # (n_input, tile)
    w1 = w1_ref[...]                                    # (n_hidden, n_input)

    # ---- Layer 1: acc = W1 @ x^T + b1 via n_input full-slab VPU FMAs --------
    # (n_hidden, 1) * (1, tile) broadcasts to the full (n_hidden, tile) slab.
    # NOTE: a stride-0 sublane-broadcast load (xT_ref[pl.ds(k, n_hidden,
    # stride=0), :]) would move this broadcast into the vector-load slot on
    # toolchains that support Slice stride=0; kept as an implicit broadcast
    # here for portability.
    acc = w1[:, 0:1] * xT[0:1, :] + b1_ref[...]
    for k in range(1, n_input):                         # n_input is tiny (=1)
        acc = acc + w1[:, k:k + 1] * xT[k:k + 1, :]

    # EUP transcendental over the (n_hidden, tile) slab -- the main compute.
    # (pl.reciprocal(1 + jnp.exp(-acc), approx=True) would shave the divide,
    #  but the exact sigmoid keeps the 1e-5 reference check tight.)
    h = jax.nn.sigmoid(acc)                             # (n_hidden, tile)

    # ---- Layer 2: y = W2 @ h + b2: full-slab multiply + XLU sublane reduce --
    w2 = w2_ref[...]                                    # (n_hidden, n_output)
    b2 = b2_ref[...]                                    # (n_output, 1)
    for o in range(n_output):                           # n_output is tiny (=1)
        row = jnp.sum(h * w2[:, o:o + 1], axis=0, keepdims=True)   # (1, tile)
        oT_ref[o:o + 1, :] = row + b2[o:o + 1, :]       # lane-dense store


def net_forward(x, w1, b1, w2, b2, *, max_tile_n=128 * 1024):
    """x: (N, n_input); w1: (n_hidden, n_input); b1: (n_hidden,);
       w2: (n_output, n_hidden); b2: (n_output,).  Matches torch.nn.Linear layout."""
    N, n_input = x.shape
    n_hidden = w1.shape[0]
    n_output = w2.shape[0]

    # Batch-on-lanes operands.  For n_input == 1 / n_output == 1 the transposes
    # degenerate to reshapes (no copy, no extra HBM pass).
    xT = x.reshape(n_input, N) if n_input == 1 else x.T
    b1c = b1.reshape(n_hidden, 1)
    w2c = w2.reshape(n_hidden, n_output) if n_output == 1 else w2.T
    b2c = b2.reshape(n_output, 1)

    # Lane tile: multiple of 128, as large as the VMEM budget allows, capped so
    # that big N gives >= 2 grid steps (the "parallel" axis can then shard
    # across v7x's two TensorCores).  Ragged last block is masked by Pallas.
    n_lanes = pl.cdiv(N, LANE) * LANE
    tile = min(max_tile_n, n_lanes)
    if n_lanes >= 2 * LANE:
        tile = min(tile, pl.cdiv(pl.cdiv(n_lanes, 2), LANE) * LANE)
    tile = max(LANE, (tile // LANE) * LANE)
    grid = (pl.cdiv(N, tile),)

    # Advisory cost so XLA can schedule around this (tiny) custom call.
    cost = pl.CostEstimate(
        flops=2 * N * (n_input * n_hidden + n_hidden * n_output),
        transcendentals=N * n_hidden,
        bytes_accessed=4 * N * (n_input + n_output),
    )

    yT = pl.pallas_call(
        mlp_kernel,
        out_shape=jax.ShapeDtypeStruct((n_output, N), jnp.float32),
        grid=grid,
        in_specs=[
            pl.BlockSpec((n_input, tile), lambda i: (0, i)),        # x^T lane tile
            pl.BlockSpec((n_hidden, n_input), lambda i: (0, 0)),    # W1 (torch layout)
            pl.BlockSpec((n_hidden, 1), lambda i: (0, 0)),          # b1 column
            pl.BlockSpec((n_hidden, n_output), lambda i: (0, 0)),   # W2 columns
            pl.BlockSpec((n_output, 1), lambda i: (0, 0)),          # b2 column
        ],
        out_specs=pl.BlockSpec((n_output, tile), lambda i: (0, i)),
        compiler_params=pltpu.CompilerParams(
            dimension_semantics=("parallel",),
            vmem_limit_bytes=48 * 1024 * 1024,
        ),
        cost_estimate=cost,
    )(xT, w1, b1c, w2c, b2c)

    # Back to the torch-style (N, n_output) layout (reshape == no copy when
    # n_output == 1).
    return yT.reshape(N, n_output) if n_output == 1 else yT.T


def init_linear(key, out_features, in_features):
    """Deterministic PyTorch-style init: U(-1/sqrt(fan_in), 1/sqrt(fan_in))."""
    kw, kb = jax.random.split(key)
    bound = 1.0 / jnp.sqrt(jnp.float32(in_features))
    w = jax.random.uniform(kw, (out_features, in_features),
                           minval=-bound, maxval=bound, dtype=jnp.float32)
    b = jax.random.uniform(kb, (out_features,),
                           minval=-bound, maxval=bound, dtype=jnp.float32)
    return w, b


if __name__ == "__main__":
    # Shapes implied by the original script: x = linspace(-1, 1, 100).unsqueeze(1)
    # i.e. N=100, n_input=1; Net(1, 10, 1).
    N, n_input, n_hidden, n_output = 100, 1, 10, 1

    key = jax.random.PRNGKey(0)
    k1, k2 = jax.random.split(key)
    w1, b1 = init_linear(k1, n_hidden, n_input)
    w2, b2 = init_linear(k2, n_output, n_hidden)

    x = jnp.linspace(-1.0, 1.0, N, dtype=jnp.float32).reshape(N, 1)

    out = jax.block_until_ready(net_forward(x, w1, b1, w2, b2))

    # Reference check in plain JAX (same math as the PyTorch forward).
    ref = jax.nn.sigmoid(x @ w1.T + b1) @ w2.T + b2
    assert out.shape == (N, n_output)
    assert jnp.allclose(out, ref, atol=1e-5, rtol=1e-5)

    print("KERNEL_OK")
</pallas_src>

<mosaic_0001>
module attributes {stable_mosaic.version = 11 : i64} {
  func.func @mlp_kernel(%arg0: i32, %arg1: memref<1x128xf32, #tpu.memory_space<vmem>>, %arg2: memref<10x1xf32, #tpu.memory_space<vmem>>, %arg3: memref<10x1xf32, #tpu.memory_space<vmem>>, %arg4: memref<10x1xf32, #tpu.memory_space<vmem>>, %arg5: memref<1x1xf32, #tpu.memory_space<vmem>>, %arg6: memref<1x128xf32, #tpu.memory_space<vmem>>) attributes {dimension_semantics = [#tpu.dimension_semantics<parallel>], iteration_bounds = array<i64: 1>, scalar_prefetch = 0 : i64, scratch_operands = 0 : i64, tpu.core_type = #tpu.core_type<tc>, window_params = [{transform_indices = @transform_0, window_bounds = array<i64: 1, 128>}, {pipeline_mode = #tpu.pipeline_mode<synchronous>, transform_indices = @transform_1, window_bounds = array<i64: 10, 1>}, {pipeline_mode = #tpu.pipeline_mode<synchronous>, transform_indices = @transform_2, window_bounds = array<i64: 10, 1>}, {pipeline_mode = #tpu.pipeline_mode<synchronous>, transform_indices = @transform_3, window_bounds = array<i64: 10, 1>}, {pipeline_mode = #tpu.pipeline_mode<synchronous>, transform_indices = @transform_4, window_bounds = array<i64: 1, 1>}, {transform_indices = @transform_5, window_bounds = array<i64: 1, 128>}]} {
    %c0 = arith.constant 0 : index
    %c0_0 = arith.constant 0 : index
    %0 = vector.load %arg1[%c0, %c0_0] : memref<1x128xf32, #tpu.memory_space<vmem>>, vector<1x128xf32>
    %c0_1 = arith.constant 0 : index
    %c0_2 = arith.constant 0 : index
    %1 = vector.load %arg2[%c0_1, %c0_2] : memref<10x1xf32, #tpu.memory_space<vmem>>, vector<10x1xf32>
    %2 = vector.broadcast %1 : vector<10x1xf32> to vector<10x128xf32>
    %3 = vector.broadcast %0 : vector<1x128xf32> to vector<10x128xf32>
    %4 = arith.mulf %2, %3 : vector<10x128xf32>
    %c0_3 = arith.constant 0 : index
    %c0_4 = arith.constant 0 : index
    %5 = vector.load %arg3[%c0_3, %c0_4] : memref<10x1xf32, #tpu.memory_space<vmem>>, vector<10x1xf32>
    %6 = vector.broadcast %5 : vector<10x1xf32> to vector<10x128xf32>
    %7 = arith.addf %4, %6 : vector<10x128xf32>
    %8 = arith.negf %7 : vector<10x128xf32>
    %9 = math.exp %8 : vector<10x128xf32>
    %cst = arith.constant 1.000000e+00 : f32
    %10 = vector.broadcast %cst : f32 to vector<10x128xf32>
    %11 = arith.addf %10, %9 : vector<10x128xf32>
    %12 = arith.divf %10, %11 : vector<10x128xf32>
    %c0_5 = arith.constant 0 : index
    %c0_6 = arith.constant 0 : index
    %13 = vector.load %arg4[%c0_5, %c0_6] : memref<10x1xf32, #tpu.memory_space<vmem>>, vector<10x1xf32>
    %c0_7 = arith.constant 0 : index
    %c0_8 = arith.constant 0 : index
    %14 = vector.load %arg5[%c0_7, %c0_8] : memref<1x1xf32, #tpu.memory_space<vmem>>, vector<1x1xf32>
    %15 = vector.broadcast %13 : vector<10x1xf32> to vector<10x128xf32>
    %16 = arith.mulf %12, %15 : vector<10x128xf32>
    %cst_9 = arith.constant dense<0.000000e+00> : vector<128xf32>
    %17 = vector.multi_reduction <add>, %16, %cst_9 [0] : vector<10x128xf32> to vector<128xf32>
    %18 = vector.shape_cast %17 : vector<128xf32> to vector<1x128xf32>
    %19 = vector.broadcast %14 : vector<1x1xf32> to vector<1x128xf32>
    %20 = arith.addf %18, %19 : vector<1x128xf32>
    %c0_10 = arith.constant 0 : index
    %c0_11 = arith.constant 0 : index
    %21 = vector.load %arg6[%c0_10, %c0_11] : memref<1x128xf32, #tpu.memory_space<vmem>>, vector<1x128xf32>
    tpu.vector_store %arg6[%c0_10, %c0_11], %20 {strides = array<i32>} : memref<1x128xf32, #tpu.memory_space<vmem>>, vector<1x128xf32>,
    return
  }
  func.func @transform_0(%arg0: i32) -> (i32, i32) {
    %c0_i32 = arith.constant 0 : i32
    %c0_i32_0 = arith.constant 0 : i32
    return %c0_i32, %arg0 : i32, i32
  }
  func.func @transform_1(%arg0: i32) -> (i32, i32) {
    %c0_i32 = arith.constant 0 : i32
    %c0_i32_0 = arith.constant 0 : i32
    %c0_i32_1 = arith.constant 0 : i32
    return %c0_i32, %c0_i32_0 : i32, i32
  }
  func.func @transform_2(%arg0: i32) -> (i32, i32) {
    %c0_i32 = arith.constant 0 : i32
    %c0_i32_0 = arith.constant 0 : i32
    %c0_i32_1 = arith.constant 0 : i32
    return %c0_i32, %c0_i32_0 : i32, i32
  }
  func.func @transform_3(%arg0: i32) -> (i32, i32) {
    %c0_i32 = arith.constant 0 : i32
    %c0_i32_0 = arith.constant 0 : i32
    %c0_i32_1 = arith.constant 0 : i32
    return %c0_i32, %c0_i32_0 : i32, i32
  }
  func.func @transform_4(%arg0: i32) -> (i32, i32) {
    %c0_i32 = arith.constant 0 : i32
    %c0_i32_0 = arith.constant 0 : i32
    %c0_i32_1 = arith.constant 0 : i32
    return %c0_i32, %c0_i32_0 : i32, i32
  }
  func.func @transform_5(%arg0: i32) -> (i32, i32) {
    %c0_i32 = arith.constant 0 : i32
    %c0_i32_0 = arith.constant 0 : i32
    return %c0_i32, %arg0 : i32, i32
  }
}

</mosaic_0001>

<llo_original>
// kernel: tpu_custom_call.1
$region0: #{tpu_custom_call.1}
  #allocation0 [shape = 'u32[]', space=smem, size = 0x4, offset = 0x4, fixed_abs, tag = 'smem constant byte address 0x4 - core index']
  #allocation1 [shape = 'u32[144,128]{1,0:T(1,128)}', space=vmem, size = 0x12000, scoped, tag = 'internal scratch']
  #allocation2 [shape = 'f32[1,1]{1,0:T(1,128)S(1)}', space=vmem, size = 0x200, scoped, tag = 'scoped memory for tpu_custom_call.1']
  %s0 = inlined_call_operand.vmem [shape: f32[1,100], index: 0, kind: input, shape index: {}]
  %s1 = inlined_call_operand.vmem [shape: f32[10,1], index: 1, kind: input, shape index: {}]
  %s2 = inlined_call_operand.vmem [shape: f32[10,1], index: 2, kind: input, shape index: {}]
  %s3 = inlined_call_operand.vmem [shape: f32[10,1], index: 3, kind: input, shape index: {}]
  %s4 = inlined_call_operand.<no memory space> [shape: f32[1,1], index: 4, kind: input, shape index: {}]
  %s5 = inlined_call_operand.hbm [shape: f32[1,100], index: 5, kind: output, shape index: {}]
  %s6 = sld [smem:[#allocation0]]
  $region30: #{tpu_custom_call.1} parent=0
    _
  %s8 = ssub.s32 1, %s6
  %s9 = scalar_select 0, %s8, %s6
  %v10 = vstv %s4
  %11 = vst [vmem:[#allocation2] sm:$0x1] %v10
  $region1: #{tpu_custom_call.1} parent=0
    #allocation3 [shape = 'u8[512]{0}', space=vmem, size = 0x400, scoped, tag = 'output window, operand 0, single buffered']
    #allocation4 [shape = 's32[1]{0}', space=sflag, size = 0x4, scoped, tag = 'scoped memory for tpu_custom_call.1']
    %12 = vsyncpa [#allocation4], 0
    // Predicated region
    $region2: #{tpu_custom_call.1} parent=1 // pred_check
      _
    $region3: #{tpu_custom_call.1} parent=1 // pred_check_branch
      %14 = sbr.rel (0) target = $region5
    $region4: #{tpu_custom_call.1} parent=1 // pred_region
      _
    $region5: #{tpu_custom_call.1} parent=1 // pred_fallthru
      _
    // Predicated region
    $region6: #{tpu_custom_call.1} parent=1 // pred_check
      _
    $region7: #{tpu_custom_call.1} parent=1 // pred_check_branch
      %16 = sbr.rel (0) target = $region9
    $region8: #{tpu_custom_call.1} parent=1 // pred_region
      _
    $region9: #{tpu_custom_call.1} parent=1 // pred_fallthru
      _
    // Predicated region
    $region10: #{tpu_custom_call.1} parent=1 // pred_check
      _
    $region11: #{tpu_custom_call.1} parent=1 // pred_check_branch
      %18 = sbr.rel (0) target = $region13
    $region12: #{tpu_custom_call.1} parent=1 // pred_region
      _
    $region13: #{tpu_custom_call.1} parent=1 // pred_fallthru
      _
    // Predicated region
    $region14: #{tpu_custom_call.1} parent=1 // pred_check
      _
    $region15: #{tpu_custom_call.1} parent=1 // pred_check_branch
      %20 = sbr.rel (0) target = $region17
    $region16: #{tpu_custom_call.1} parent=1 // pred_region
      _
    $region17: #{tpu_custom_call.1} parent=1 // pred_fallthru
      _
    // Predicated region
    $region18: #{tpu_custom_call.1} parent=1 // pred_check
      _
    $region19: #{tpu_custom_call.1} parent=1 // pred_check_branch
      %22 = sbr.rel (0) target = $region21
    $region20: #{tpu_custom_call.1} parent=1 // pred_region
      _
    $region21: #{tpu_custom_call.1} parent=1 // pred_fallthru
      _
    %v23 = vld [vmem:[%s0] sm:$0x1]
    %v24 = vld [vmem:[%s1] sm:$0xff]
    %v25 = vld [vmem:[%s1 + $0x8] sm:$0x3]
    %27 = vset.pattern.permute.xlu0 0
    %28 = vperm.xlu0 %27, %v24
    %v29 = vpop.permute.xlu0 %28
    %32 = vset.pattern.permute.xlu0 0
    %33 = vperm.xlu0 %32, %v25
    %v34 = vpop.permute.xlu0 %33
    %v37 = vlaneseq
    %v38 = vshrl.u32 %v37, 7
    %v39 = vsub.s32 0, %v38
    %v40 = vrot.slane %v23, %v39
    %v42 = vmul.f32 %v29, %v40
    %v43 = vmul.f32 %v34, %v40
    %v44 = vld [vmem:[%s2] sm:$0xff]
    %v45 = vld [vmem:[%s2 + $0x8] sm:$0x3]
    %47 = vset.pattern.permute.xlu0 0
    %48 = vperm.xlu0 %47, %v44
    %v49 = vpop.permute.xlu0 %48
    %52 = vset.pattern.permute.xlu0 0
    %53 = vperm.xlu0 %52, %v45
    %v54 = vpop.permute.xlu0 %53
    %v56 = vadd.f32 %v42, %v49
    %v57 = vadd.f32 %v43, %v54
    %v58 = vxor.u32 %v56, 2147483648
    %v59 = vxor.u32 %v57, 2147483648
    %v60 = vmul.f32 %v58, 1.442695
    %v61 = vpow.pop %v60
    %v62 = vmul.f32 %v59, 1.442695
    %v63 = vpow.pop %v62
    %v64 = vadd.f32 %v61, 1.0
    %v65 = vadd.f32 %v63, 1.0
    %v66 = vrcp.pop %v64
    %v67 = vmul.f32 1.0, %v66
    %v68 = vrcp.pop %v65
    %v69 = vmul.f32 1.0, %v68
    %v70 = vld [vmem:[%s3] sm:$0xff]
    %v71 = vld [vmem:[%s3 + $0x8] sm:$0x3]
    %v72 = vld [vmem:[#allocation2] sm:$0x1]
    %74 = vset.pattern.permute.xlu0 0
    %75 = vperm.xlu0 %74, %v70
    %v76 = vpop.permute.xlu0 %75
    %79 = vset.pattern.permute.xlu0 0
    %80 = vperm.xlu0 %79, %v71
    %v81 = vpop.permute.xlu0 %80
    %v83 = vmul.f32 %v67, %v76
    %v84 = vmul.f32 %v69, %v81
    %vm85 = vcmask 1041408
    %v86 = vsel %vm85, %v84, 0.0
    %v87 = vadd.f32 %v83, %v86
    %v88 = vrot.slane %v87, 4
    %v89 = vadd.f32 %v87, %v88
    %v90 = vrot.slane %v89, 2
    %v91 = vadd.f32 %v89, %v90
    %v92 = vrot.slane %v91, 1
    %v93 = vadd.f32 %v91, %v92
    %95 = vset.pattern.permute.xlu0 0
    %96 = vperm.xlu0 %95, %v72
    %v97 = vpop.permute.xlu0 %96
    %v99 = vlaneseq
    %v100 = vshrl.u32 %v99, 7
    %v101 = vsub.s32 0, %v100
    %v102 = vrot.slane %v97, %v101
    %v103 = vadd.f32 %v93, %v102
    %104 = vst [vmem:[#allocation3] sm:$0x1] %v103
    // Predicated region
    $region22: #{tpu_custom_call.1} parent=1 // pred_check
      _
    $region23: #{tpu_custom_call.1} parent=1 // pred_check_branch
      %106 = sbr.rel (0) target = $region25
    $region24: #{tpu_custom_call.1} parent=1 // pred_region
      %s108 = ssub.s32 16, 16
      %109 = vsyncadd [#allocation4], %s108
      %s111 = sshll.u32 [#allocation3], 4
      %s112 = int_to_ptr.vmem [resolvable:$true] %s111
      %114 = dma.vmem_to_hbm [thread:$0]  %s112, 16, %s5, [#allocation4]
    $region25: #{tpu_custom_call.1} parent=1 // pred_fallthru
      _
    // Predicated region
    $region26: #{tpu_custom_call.1} parent=1 // pred_check
      _
    $region27: #{tpu_custom_call.1} parent=1 // pred_check_branch
      %116 = sbr.rel (0) target = $region29
    $region28: #{tpu_custom_call.1} parent=1 // pred_region
      %117 = dma.done [#allocation4], 16
    $region29: #{tpu_custom_call.1} parent=1 // pred_fallthru
      _
    %118 = vsyncpa [#allocation4], 1

</llo_original>
